<compile_context>
chip_gen: v5e
topology: v5e:2x2
jax: 0.10.0
libtpu: 0.0.40
codegen_flags: <defaults>
</compile_context>

<pallas_src>
import jax
import jax.numpy as jnp
from jax.experimental import pallas as pl
from jax.experimental.pallas import tpu as pltpu


def _round_up(x: int, m: int) -> int:
    return ((x + m - 1) // m) * m


def _cls_head_kernel(x_ref, w1_ref, b1_ref, w2_ref, b2_ref, out_ref):
    # dropout (eval mode) -> identity
    x = x_ref[...].astype(w1_ref.dtype)                              # in-kernel cast (VPU slack)
    h = jnp.dot(x, w1_ref[...], preferred_element_type=jnp.float32)  # (TM, D_inner_p) f32 acc
    # f32 bias-add; tanh in the param dtype (bf16 EUP path on v6e/v7x; the
    # second GEMM consumes that dtype anyway and tanh output is in [-1, 1]).
    h = jnp.tanh((h + b1_ref[...]).astype(w2_ref.dtype))
    o = jnp.dot(h, w2_ref[...], preferred_element_type=jnp.float32)  # (TM, C_p) f32 acc
    out_ref[...] = (o + b2_ref[...]).astype(out_ref.dtype)


def prepare_classification_head_params(w_dense, b_dense, w_out, b_out,
                                       *, param_dtype=jnp.bfloat16):
    """One-time weight prep, hoisted out of the per-call path.

    Inputs use the PyTorch nn.Linear layout:
      w_dense: (inner_dim, input_dim),   b_dense: (inner_dim,)
      w_out:   (num_classes, inner_dim), b_out:   (num_classes,)

    Returns transposed, lane-padded `param_dtype` weights and f32 biases.
    Set param_dtype=jnp.float32 for a full-precision path (e.g. on v5e).
    """
    d_inner, d_in = w_dense.shape
    n_classes = w_out.shape[0]
    d_inner_p = _round_up(d_inner, 128)
    c_p = _round_up(n_classes, 128)

    w1 = jnp.zeros((d_in, d_inner_p), param_dtype)
    w1 = w1.at[:, :d_inner].set(w_dense.T.astype(param_dtype))
    b1 = jnp.zeros((1, d_inner_p), jnp.float32)
    b1 = b1.at[0, :d_inner].set(b_dense.astype(jnp.float32))
    w2 = jnp.zeros((d_inner_p, c_p), param_dtype)
    w2 = w2.at[:d_inner, :n_classes].set(w_out.T.astype(param_dtype))
    b2 = jnp.zeros((1, c_p), jnp.float32)
    b2 = b2.at[0, :n_classes].set(b_out.astype(jnp.float32))
    return {"w1": w1, "b1": b1, "w2": w2, "b2": b2, "num_classes": n_classes}


def multimodal_bart_classification(hidden_states, params, *, tm=1024,
                                   out_dtype=None, force_pallas=False):
    """hidden_states: (..., input_dim); params from prepare_classification_head_params."""
    w1_p, b1_p = params["w1"], params["b1"]
    w2_p, b2_p = params["w2"], params["b2"]
    n_classes = params["num_classes"]

    orig_shape = hidden_states.shape
    d_in = orig_shape[-1]
    assert w1_p.shape[0] == d_in, "input_dim mismatch between x and prepared params"
    c_p = w2_p.shape[1]
    out_dtype = hidden_states.dtype if out_dtype is None else jnp.dtype(out_dtype)

    x2d = hidden_states.reshape(-1, d_in)
    n_rows = x2d.shape[0]

    # Small-problem fast path: a kernel launch + class padding is dominated by
    # fixed overhead for tiny N*D; a plain fused XLA matmul wins outright.
    if not force_pallas and n_rows * d_in < (1 << 15):
        h = jnp.tanh(jnp.dot(x2d.astype(w1_p.dtype), w1_p,
                             preferred_element_type=jnp.float32) + b1_p)
        o = jnp.dot(h.astype(w2_p.dtype), w2_p,
                    preferred_element_type=jnp.float32) + b2_p
        return o[:, :n_classes].astype(out_dtype).reshape(*orig_shape[:-1], n_classes)

    # Row tile: multiple of 8 sublanes; partial last tile is handled by Pallas.
    tm_eff = min(tm, _round_up(n_rows, 8))
    # v7x megacore: make sure a large-but-single-tile problem is split so both
    # TensorCores get a share of the "parallel" row axis.
    if n_rows >= 1024 and pl.cdiv(n_rows, tm_eff) == 1:
        tm_eff = _round_up(pl.cdiv(n_rows, 2), 8)
    grid = (pl.cdiv(n_rows, tm_eff),)

    # Conservative VMEM budget: 2x x-tile + 2x out-tile + single-buffered weights.
    est = (2 * tm_eff * d_in * hidden_states.dtype.itemsize
           + 2 * tm_eff * c_p * out_dtype.itemsize
           + w1_p.nbytes + w2_p.nbytes + b1_p.nbytes + b2_p.nbytes)
    vmem_limit = min(max(32 * 1024 * 1024, int(1.5 * est)), 96 * 1024 * 1024)

    def _const_spec(shape):
        # Grid-invariant operand: constant index_map, single VMEM buffer.
        return pl.BlockSpec(shape, lambda i: (0, 0), pipeline_mode=pl.Buffered(1))

    out_p = pl.pallas_call(
        _cls_head_kernel,
        out_shape=jax.ShapeDtypeStruct((n_rows, c_p), out_dtype),
        grid_spec=pltpu.PrefetchScalarGridSpec(
            num_scalar_prefetch=0,
            grid=grid,
            in_specs=[
                pl.BlockSpec((tm_eff, d_in), lambda i: (i, 0)),  # x tile (pipelined)
                _const_spec(w1_p.shape),                         # w1 (VMEM-resident)
                _const_spec(b1_p.shape),                         # b1
                _const_spec(w2_p.shape),                         # w2
                _const_spec(b2_p.shape),                         # b2
            ],
            out_specs=pl.BlockSpec((tm_eff, c_p), lambda i: (i, 0)),
        ),
        compiler_params=pltpu.CompilerParams(
            dimension_semantics=("parallel",),
            vmem_limit_bytes=vmem_limit,
        ),
    )(x2d, w1_p, b1_p, w2_p, b2_p)

    out2d = out_p[:, :n_classes]
    return out2d.reshape(*orig_shape[:-1], n_classes)


if __name__ == "__main__":
    # Small module config consistent with the BART classification head.
    input_dim = 32
    inner_dim = 32
    num_classes = 4
    batch, seq = 2, 8

    key = jax.random.PRNGKey(0)
    k_x, k_w1, k_b1, k_w2, k_b2 = jax.random.split(key, 5)

    # hidden_states: (batch, seq, input_dim)
    hidden_states = jax.random.normal(k_x, (batch, seq, input_dim), jnp.float32)

    # Parameters in nn.Linear layout.
    w_dense = jax.random.normal(k_w1, (inner_dim, input_dim), jnp.float32) * 0.02
    b_dense = jax.random.normal(k_b1, (inner_dim,), jnp.float32) * 0.02
    w_out = jax.random.normal(k_w2, (num_classes, inner_dim), jnp.float32) * 0.02
    b_out = jax.random.normal(k_b2, (num_classes,), jnp.float32) * 0.02

    # One-time weight prep (hoisted out of the per-call path).
    params = prepare_classification_head_params(w_dense, b_dense, w_out, b_out)

    # Pallas path (forced so the kernel itself is exercised at demo size).
    out = multimodal_bart_classification(hidden_states, params, force_pallas=True)
    out = jax.block_until_ready(out)
    assert out.shape == (batch, seq, num_classes)

    # Reference in plain f32 JAX (eval-mode semantics); bf16 params introduce
    # small error -> relaxed tolerance.
    x2d = hidden_states.reshape(batch * seq, input_dim)
    ref = jnp.tanh(x2d @ w_dense.T + b_dense) @ w_out.T + b_out
    ref = ref.reshape(batch, seq, num_classes)
    assert jnp.allclose(out, ref, atol=2e-2, rtol=2e-2), "pallas path mismatch vs reference"

    # Small-N fast path (plain XLA) should agree too.
    out_fast = jax.block_until_ready(
        multimodal_bart_classification(hidden_states, params))
    assert jnp.allclose(out_fast, ref, atol=2e-2, rtol=2e-2), "fast path mismatch vs reference"

    print("KERNEL_OK")
</pallas_src>

<mosaic_0001>
module attributes {stable_mosaic.version = 11 : i64} {
  func.func @_cls_head_kernel(%arg0: i32, %arg1: memref<16x32xf32, #tpu.memory_space<vmem>>, %arg2: memref<32x128xbf16, #tpu.memory_space<vmem>>, %arg3: memref<1x128xf32, #tpu.memory_space<vmem>>, %arg4: memref<128x128xbf16, #tpu.memory_space<vmem>>, %arg5: memref<1x128xf32, #tpu.memory_space<vmem>>, %arg6: memref<16x128xf32, #tpu.memory_space<vmem>>) attributes {dimension_semantics = [#tpu.dimension_semantics<parallel>], iteration_bounds = array<i64: 1>, scalar_prefetch = 0 : i64, scratch_operands = 0 : i64, tpu.core_type = #tpu.core_type<tc>, window_params = [{transform_indices = @transform_0, window_bounds = array<i64: 16, 32>}, {pipeline_mode = #tpu.pipeline_mode<synchronous>, transform_indices = @transform_1, window_bounds = array<i64: 32, 128>}, {pipeline_mode = #tpu.pipeline_mode<synchronous>, transform_indices = @transform_2, window_bounds = array<i64: 1, 128>}, {pipeline_mode = #tpu.pipeline_mode<synchronous>, transform_indices = @transform_3, window_bounds = array<i64: 128, 128>}, {pipeline_mode = #tpu.pipeline_mode<synchronous>, transform_indices = @transform_4, window_bounds = array<i64: 1, 128>}, {transform_indices = @transform_5, window_bounds = array<i64: 16, 128>}]} {
    %c0 = arith.constant 0 : index
    %c0_0 = arith.constant 0 : index
    %0 = vector.load %arg1[%c0, %c0_0] : memref<16x32xf32, #tpu.memory_space<vmem>>, vector<16x32xf32>
    %1 = arith.truncf %0 : vector<16x32xf32> to vector<16x32xbf16>
    %c0_1 = arith.constant 0 : index
    %c0_2 = arith.constant 0 : index
    %2 = vector.load %arg2[%c0_1, %c0_2] : memref<32x128xbf16, #tpu.memory_space<vmem>>, vector<32x128xbf16>
    %cst = arith.constant dense<0.000000e+00> : vector<16x128xf32>
    %3 = tpu.matmul %1, %2, %cst {dimension_numbers = #tpu.dot_dimension_numbers<[1], [0], [0], [1], [0, 0, 1, 1], [], []>} : vector<16x32xbf16>, vector<32x128xbf16>, vector<16x128xf32> -> vector<16x128xf32>
    %c0_3 = arith.constant 0 : index
    %c0_4 = arith.constant 0 : index
    %4 = vector.load %arg3[%c0_3, %c0_4] : memref<1x128xf32, #tpu.memory_space<vmem>>, vector<1x128xf32>
    %5 = vector.broadcast %4 : vector<1x128xf32> to vector<16x128xf32>
    %6 = arith.addf %3, %5 : vector<16x128xf32>
    %7 = arith.truncf %6 : vector<16x128xf32> to vector<16x128xbf16>
    %8 = math.tanh %7 : vector<16x128xbf16>
    %c0_5 = arith.constant 0 : index
    %c0_6 = arith.constant 0 : index
    %9 = vector.load %arg4[%c0_5, %c0_6] : memref<128x128xbf16, #tpu.memory_space<vmem>>, vector<128x128xbf16>
    %cst_7 = arith.constant dense<0.000000e+00> : vector<16x128xf32>
    %10 = tpu.matmul %8, %9, %cst_7 {dimension_numbers = #tpu.dot_dimension_numbers<[1], [0], [0], [1], [0, 0, 1, 1], [], []>} : vector<16x128xbf16>, vector<128x128xbf16>, vector<16x128xf32> -> vector<16x128xf32>
    %c0_8 = arith.constant 0 : index
    %c0_9 = arith.constant 0 : index
    %11 = vector.load %arg5[%c0_8, %c0_9] : memref<1x128xf32, #tpu.memory_space<vmem>>, vector<1x128xf32>
    %12 = vector.broadcast %11 : vector<1x128xf32> to vector<16x128xf32>
    %13 = arith.addf %10, %12 : vector<16x128xf32>
    %c0_10 = arith.constant 0 : index
    %c0_11 = arith.constant 0 : index
    %14 = vector.load %arg6[%c0_10, %c0_11] : memref<16x128xf32, #tpu.memory_space<vmem>>, vector<16x128xf32>
    tpu.vector_store %arg6[%c0_10, %c0_11], %13 {strides = array<i32>} : memref<16x128xf32, #tpu.memory_space<vmem>>, vector<16x128xf32>,
    return
  }
  func.func @transform_0(%arg0: i32) -> (i32, i32) {
    %c0_i32 = arith.constant 0 : i32
    %c0_i32_0 = arith.constant 0 : i32
    return %arg0, %c0_i32 : i32, i32
  }
  func.func @transform_1(%arg0: i32) -> (i32, i32) {
    %c0_i32 = arith.constant 0 : i32
    %c0_i32_0 = arith.constant 0 : i32
    %c0_i32_1 = arith.constant 0 : i32
    return %c0_i32, %c0_i32_0 : i32, i32
  }
  func.func @transform_2(%arg0: i32) -> (i32, i32) {
    %c0_i32 = arith.constant 0 : i32
    %c0_i32_0 = arith.constant 0 : i32
    %c0_i32_1 = arith.constant 0 : i32
    return %c0_i32, %c0_i32_0 : i32, i32
  }
  func.func @transform_3(%arg0: i32) -> (i32, i32) {
    %c0_i32 = arith.constant 0 : i32
    %c0_i32_0 = arith.constant 0 : i32
    %c0_i32_1 = arith.constant 0 : i32
    return %c0_i32, %c0_i32_0 : i32, i32
  }
  func.func @transform_4(%arg0: i32) -> (i32, i32) {
    %c0_i32 = arith.constant 0 : i32
    %c0_i32_0 = arith.constant 0 : i32
    %c0_i32_1 = arith.constant 0 : i32
    return %c0_i32, %c0_i32_0 : i32, i32
  }
  func.func @transform_5(%arg0: i32) -> (i32, i32) {
    %c0_i32 = arith.constant 0 : i32
    %c0_i32_0 = arith.constant 0 : i32
    return %arg0, %c0_i32 : i32, i32
  }
}

</mosaic_0001>

<llo_original>
// kernel: tpu_custom_call.1
$region0: #{tpu_custom_call.1}
  #allocation0 [shape = 'u32[]', space=smem, size = 0x4, offset = 0x4, fixed_abs, tag = 'smem constant byte address 0x4 - core index']
  #allocation1 [shape = 'u32[72,128]{1,0:T(1,128)}', space=vmem, size = 0x9000, scoped, tag = 'internal scratch']
  %s0 = inlined_call_operand.hbm [shape: f32[16,32], index: 0, kind: input, shape index: {}]
  %s1 = inlined_call_operand.hbm [shape: bf16[32,128], index: 1, kind: input, shape index: {}]
  %s2 = inlined_call_operand.vmem [shape: f32[1,128], index: 2, kind: input, shape index: {}]
  %s3 = inlined_call_operand.hbm [shape: bf16[128,128], index: 3, kind: input, shape index: {}]
  %s4 = inlined_call_operand.vmem [shape: f32[1,128], index: 4, kind: input, shape index: {}]
  %s5 = inlined_call_operand.hbm [shape: f32[16,128], index: 5, kind: output, shape index: {}]
  %s6 = sld [smem:[#allocation0]]
  $region42: #{tpu_custom_call.1} parent=0
    _
  %s8 = ssub.s32 1, %s6
  %s9 = scalar_select 0, %s8, %s6
  $region1: #{tpu_custom_call.1} parent=0
    #allocation2 [shape = 'u8[8192]{0}', space=vmem, size = 0x2000, scoped, tag = 'input window, operand 0, single buffered']
    #allocation3 [shape = 's32[1]{0}', space=sflag, size = 0x4, scoped, tag = 'scoped memory for tpu_custom_call.1']
    #allocation4 [shape = 's32[1]{0}', space=sflag, size = 0x4, scoped, tag = 'scoped memory for tpu_custom_call.1']
    #allocation5 [shape = 'u8[8192]{0}', space=vmem, size = 0x2000, scoped, tag = 'input window, operand 1, single buffered']
    #allocation6 [shape = 's32[1]{0}', space=sflag, size = 0x4, scoped, tag = 'scoped memory for tpu_custom_call.1']
    #allocation7 [shape = 'u8[32768]{0}', space=vmem, size = 0x8000, scoped, tag = 'input window, operand 3, single buffered']
    #allocation8 [shape = 'u8[8192]{0}', space=vmem, size = 0x2000, scoped, tag = 'output window, operand 0, single buffered']
    %10 = vsyncpa [#allocation3], 0
    %11 = vsyncpa [#allocation6], 0
    %12 = vsyncpa [#allocation4], 0
    // Predicated region
    $region2: #{tpu_custom_call.1} parent=1 // pred_check
      _
    $region3: #{tpu_custom_call.1} parent=1 // pred_check_branch
      %14 = sbr.rel (0) target = $region5
    $region4: #{tpu_custom_call.1} parent=1 // pred_region
      %16 = vsyncadd [#allocation3], 0
      %s17 = sshll.u32 %s0, 4
      %s18 = int_to_ptr.hbm [resolvable:$true] %s17
      %s19 = sshll.u32 [#allocation2], 4
      %s20 = int_to_ptr.vmem [resolvable:$true] %s19
      %25 = dma.hbm_to_vmem [thread:$0]  %s18, 256, %s20, [#allocation3], 128, 128, 8
    $region5: #{tpu_custom_call.1} parent=1 // pred_fallthru
      _
    // Predicated region
    $region6: #{tpu_custom_call.1} parent=1 // pred_check
      _
    $region7: #{tpu_custom_call.1} parent=1 // pred_check_branch
      %27 = sbr.rel (0) target = $region9
    $region8: #{tpu_custom_call.1} parent=1 // pred_region
      %29 = vsyncadd [#allocation6], 0
      %s30 = sshll.u32 %s1, 4
      %s31 = int_to_ptr.hbm [resolvable:$true] %s30
      %s32 = sshll.u32 [#allocation5], 4
      %s33 = int_to_ptr.vmem [resolvable:$true] %s32
      %38 = dma.hbm_to_vmem [thread:$0]  %s31, 256, %s33, [#allocation6], 64, 64, 4
    $region9: #{tpu_custom_call.1} parent=1 // pred_fallthru
      _
    // Predicated region
    $region10: #{tpu_custom_call.1} parent=1 // pred_check
      _
    $region11: #{tpu_custom_call.1} parent=1 // pred_check_branch
      %40 = sbr.rel (0) target = $region13
    $region12: #{tpu_custom_call.1} parent=1 // pred_region
      _
    $region13: #{tpu_custom_call.1} parent=1 // pred_fallthru
      _
    // Predicated region
    $region14: #{tpu_custom_call.1} parent=1 // pred_check
      _
    $region15: #{tpu_custom_call.1} parent=1 // pred_check_branch
      %42 = sbr.rel (0) target = $region17
    $region16: #{tpu_custom_call.1} parent=1 // pred_region
      %44 = vsyncadd [#allocation6], 0
      %s45 = sshll.u32 %s3, 4
      %s46 = int_to_ptr.hbm [resolvable:$true] %s45
      %s47 = sshll.u32 [#allocation7], 4
      %s48 = int_to_ptr.vmem [resolvable:$true] %s47
      %53 = dma.hbm_to_vmem [thread:$0]  %s46, 1024, %s48, [#allocation6], 64, 64, 4
    $region17: #{tpu_custom_call.1} parent=1 // pred_fallthru
      _
    // Predicated region
    $region18: #{tpu_custom_call.1} parent=1 // pred_check
      _
    $region19: #{tpu_custom_call.1} parent=1 // pred_check_branch
      %55 = sbr.rel (0) target = $region21
    $region20: #{tpu_custom_call.1} parent=1 // pred_region
      _
    $region21: #{tpu_custom_call.1} parent=1 // pred_fallthru
      _
    // Predicated region
    $region22: #{tpu_custom_call.1} parent=1 // pred_check
      _
    $region23: #{tpu_custom_call.1} parent=1 // pred_check_branch
      %57 = sbr.rel (0) target = $region25
    $region24: #{tpu_custom_call.1} parent=1 // pred_region
      %59 = dma.done [#allocation3], 256
    $region25: #{tpu_custom_call.1} parent=1 // pred_fallthru
      _
    // Predicated region
    $region26: #{tpu_custom_call.1} parent=1 // pred_check
      _
    $region27: #{tpu_custom_call.1} parent=1 // pred_check_branch
      %61 = sbr.rel (0) target = $region29
    $region28: #{tpu_custom_call.1} parent=1 // pred_region
      %63 = dma.done [#allocation6], 256
    $region29: #{tpu_custom_call.1} parent=1 // pred_fallthru
      _
    // Predicated region
    $region30: #{tpu_custom_call.1} parent=1 // pred_check
      _
    $region31: #{tpu_custom_call.1} parent=1 // pred_check_branch
      %65 = sbr.rel (0) target = $region33
    $region32: #{tpu_custom_call.1} parent=1 // pred_region
      %67 = dma.done [#allocation6], 1024
    $region33: #{tpu_custom_call.1} parent=1 // pred_fallthru
      _
    %v69 = vld [vmem:[#allocation2] sm:$0xff]
    %v70 = vld [vmem:[#allocation2 + $0x8] sm:$0xff]
    %v71 = vpack.c.bf16 %v70, %v69
    %v72 = vld [vmem:[#allocation5] sm:$0xf]
    %v73 = vld [vmem:[#allocation5 + $0x4] sm:$0xf]
    %v74 = vld [vmem:[#allocation5 + $0x8] sm:$0xf]
    %v75 = vld [vmem:[#allocation5 + $0xc] sm:$0xf]
    %v76 = vld [vmem:[%s2] sm:$0x1]
    %v78 = vperm.slane %v76, 0
    %v84 = vunpack.c.l.b16 %v72
    %v85 = vunpack.c.l.b16 %v73
    %v86 = vunpack.c.l.b16 %v74
    %v87 = vunpack.c.l.b16 %v75
    %v88 = vpack.c.b16 %v85, %v84
    %v89 = vpack.c.b16 %v87, %v86
    %vm92 = vcmask 261120
    %v94 = vsel %vm92, %v71, 0
    %96 = vmatpush.bf16.msra.mxu0 0
    %97 = vmatpush.bf16.msra.mxu0 0
    %98 = vmatpush.bf16.msra.mxu0 0
    %99 = vmatpush.bf16.msra.mxu0 0
    %100 = vmatpush.bf16.msra.mxu0 0
    %101 = vmatpush.bf16.msra.mxu0 0
    %102 = vmatpush.bf16.msra.mxu0 %v89
    %103 = vmatpush.bf16.msra.mxu0 %v88
    %104 = vmatmul.bf16.gmra.mxu0 %v94
    %v105 = vpop.f32.mrf.mxu0
    %v106 = vadd.f32 %v78, %v105
    %v107 = vpop.f32.mrf.mxu0
    %v108 = vadd.f32 %v78, %v107
    %109 = vdwg.mxu0
    %v110 = vpack.c.bf16 %v108, %v106
    %v111 = vunpack.c.l.bf16 %v110
    %v112 = vunpack.c.h.bf16 %v110
    %v113 = vtanh.pop %v111
    %v114 = vtanh.pop %v112
    %v115 = vpack.c.bf16 %v114, %v113
    %v116 = vld [vmem:[#allocation7] sm:$0xf]
    %v117 = vld [vmem:[#allocation7 + $0x4] sm:$0xf]
    %v118 = vld [vmem:[#allocation7 + $0x8] sm:$0xf]
    %v119 = vld [vmem:[#allocation7 + $0xc] sm:$0xf]
    %v120 = vld [vmem:[#allocation7 + $0x10] sm:$0xf]
    %v121 = vld [vmem:[#allocation7 + $0x14] sm:$0xf]
    %v122 = vld [vmem:[#allocation7 + $0x18] sm:$0xf]
    %v123 = vld [vmem:[#allocation7 + $0x1c] sm:$0xf]
    %v124 = vld [vmem:[#allocation7 + $0x20] sm:$0xf]
    %v125 = vld [vmem:[#allocation7 + $0x24] sm:$0xf]
    %v126 = vld [vmem:[#allocation7 + $0x28] sm:$0xf]
    %v127 = vld [vmem:[#allocation7 + $0x2c] sm:$0xf]
    %v128 = vld [vmem:[#allocation7 + $0x30] sm:$0xf]
    %v129 = vld [vmem:[#allocation7 + $0x34] sm:$0xf]
    %v130 = vld [vmem:[#allocation7 + $0x38] sm:$0xf]
    %v131 = vld [vmem:[#allocation7 + $0x3c] sm:$0xf]
    %v132 = vld [vmem:[%s4] sm:$0x1]
    %v134 = vperm.slane %v132, 0
    %v152 = vunpack.c.l.b16 %v116
    %v153 = vunpack.c.l.b16 %v117
    %v154 = vunpack.c.l.b16 %v118
    %v155 = vunpack.c.l.b16 %v119
    %v156 = vunpack.c.l.b16 %v120
    %v157 = vunpack.c.l.b16 %v121
    %v158 = vunpack.c.l.b16 %v122
    %v159 = vunpack.c.l.b16 %v123
    %v160 = vunpack.c.l.b16 %v124
    %v161 = vunpack.c.l.b16 %v125
    %v162 = vunpack.c.l.b16 %v126
    %v163 = vunpack.c.l.b16 %v127
    %v164 = vunpack.c.l.b16 %v128
    %v165 = vunpack.c.l.b16 %v129
    %v166 = vunpack.c.l.b16 %v130
    %v167 = vunpack.c.l.b16 %v131
    %v168 = vpack.c.b16 %v153, %v152
    %v169 = vpack.c.b16 %v155, %v154
    %v170 = vpack.c.b16 %v157, %v156
    %v171 = vpack.c.b16 %v159, %v158
    %v172 = vpack.c.b16 %v161, %v160
    %v173 = vpack.c.b16 %v163, %v162
    %v174 = vpack.c.b16 %v165, %v164
    %v175 = vpack.c.b16 %v167, %v166
    %184 = vmatpush.bf16.msra.mxu0 %v175
    %185 = vmatpush.bf16.msra.mxu0 %v174
    %186 = vmatpush.bf16.msra.mxu0 %v173
    %187 = vmatpush.bf16.msra.mxu0 %v172
    %188 = vmatpush.bf16.msra.mxu0 %v171
    %189 = vmatpush.bf16.msra.mxu0 %v170
    %190 = vmatpush.bf16.msra.mxu0 %v169
    %191 = vmatpush.bf16.msra.mxu0 %v168
    %192 = vmatmul.bf16.gmra.mxu0 %v115
    %v193 = vpop.f32.mrf.mxu0
    %v194 = vadd.f32 %v134, %v193
    %v195 = vpop.f32.mrf.mxu0
    %v196 = vadd.f32 %v134, %v195
    %197 = vdwg.mxu0
    %198 = vst [vmem:[#allocation8] sm:$0xff] %v194
    %199 = vst [vmem:[#allocation8 + $0x8] sm:$0xff] %v196
    // Predicated region
    $region34: #{tpu_custom_call.1} parent=1 // pred_check
      _
    $region35: #{tpu_custom_call.1} parent=1 // pred_check_branch
      %201 = sbr.rel (0) target = $region37
    $region36: #{tpu_custom_call.1} parent=1 // pred_region
      %203 = vsyncadd [#allocation4], 0
      %s204 = sshll.u32 [#allocation8], 4
      %s205 = int_to_ptr.vmem [resolvable:$true] %s204
      %s206 = sshll.u32 %s5, 4
      %s207 = int_to_ptr.hbm [resolvable:$true] %s206
      %212 = dma.vmem_to_hbm [thread:$0]  %s205, 256, %s207, [#allocation4], 128, 128, 8
    $region37: #{tpu_custom_call.1} parent=1 // pred_fallthru
      _
    // Predicated region
    $region38: #{tpu_custom_call.1} parent=1 // pred_check
      _
    $region39: #{tpu_custom_call.1} parent=1 // pred_check_branch
      %214 = sbr.rel (0) target = $region41
    $region40: #{tpu_custom_call.1} parent=1 // pred_region
      %216 = dma.done [#allocation4], 256
    $region41: #{tpu_custom_call.1} parent=1 // pred_fallthru
      _
    %217 = vsyncpa [#allocation3], 1
    %218 = vsyncpa [#allocation6], 1
    %219 = vsyncpa [#allocation4], 1

</llo_original>
